<compile_context>
chip_gen: v7x
topology: tpu7x:2x2x1
jax: 0.10.0
libtpu: 0.0.40
codegen_flags: <defaults>
</compile_context>

<pallas_src>
import functools
import math

import jax
import jax.numpy as jnp
from jax import lax
from jax.experimental import pallas as pl
from jax.experimental.pallas import tpu as pltpu


def _round_up(x, m):
    return ((x + m - 1) // m) * m


# ----------------------------------------------------------------------------
# mode='embedding'
# ----------------------------------------------------------------------------
def _embed_kernel(ids_smem, emb_ref, out_ref, *, scale, block_tokens):
    """Gather `block_tokens` rows from the VMEM-resident table."""
    base = pl.program_id(0) * block_tokens

    def body(t, carry):
        idx = ids_smem[base + t]                     # scalar read from SMEM
        row = emb_ref[pl.ds(idx, 1), :]              # (1, d_model) dynamic row
        out_ref[pl.ds(t, 1), :] = row * scale
        return carry

    lax.fori_loop(0, block_tokens, body, 0, unroll=block_tokens <= 32)


def embedding_mode(ids, emb, *, block_tokens=256):
    b, s = ids.shape
    vocab, d_model = emb.shape
    n = b * s
    scale = float(math.sqrt(d_model))

    # Clamp out-of-range ids (guards the in-kernel dynamic row load).
    flat_ids = jnp.clip(ids.reshape(n).astype(jnp.int32), 0, vocab - 1)

    # Block of tokens per grid step: big enough to amortize per-step overhead,
    # sublane-dense (multiple of 8), never larger than (padded) n.
    tb = min(block_tokens, _round_up(n, 8))
    n_pad = _round_up(n, tb)
    flat_ids = jnp.pad(flat_ids, (0, n_pad - n))      # pad with id 0 (valid)

    out = pl.pallas_call(
        functools.partial(_embed_kernel, scale=scale, block_tokens=tb),
        out_shape=jax.ShapeDtypeStruct((n_pad, d_model), emb.dtype),
        grid_spec=pltpu.PrefetchScalarGridSpec(
            num_scalar_prefetch=1,                    # ids -> SMEM
            grid=(n_pad // tb,),
            in_specs=[
                # Whole embedding table resident in VMEM (one bulk DMA).
                pl.BlockSpec((vocab, d_model), lambda i, ids_ref: (0, 0)),
            ],
            out_specs=pl.BlockSpec((tb, d_model), lambda i, ids_ref: (i, 0)),
        ),
        compiler_params=pltpu.CompilerParams(
            dimension_semantics=("parallel",)),
    )(flat_ids, emb)
    return out[:n].reshape(b, s, d_model)


# ----------------------------------------------------------------------------
# mode='linear'
# ----------------------------------------------------------------------------
def _linear_kernel(x_ref, w_ref, b_ref, o_ref, *, inv_scale):
    # Contract last dims of both operands: (tm, d) x (tv, d) -> (tm, tv).
    # No in-kernel transpose (lowers straight to the MXU).
    acc = lax.dot_general(
        x_ref[...], w_ref[...],
        dimension_numbers=(((1,), (1,)), ((), ())),
        preferred_element_type=jnp.float32,
    )
    o_ref[...] = ((acc + b_ref[...]) * inv_scale).astype(o_ref.dtype)


def linear_mode(x, emb, bias, *, tm=256, tv=256):
    b, s, d_model = x.shape
    vocab = emb.shape[0]
    m = b * s
    inv_scale = 1.0 / math.sqrt(d_model)

    # Tile sizes: sublane-dense M tile, lane-dense (multiple of 128) vocab tile.
    tm = min(tm, _round_up(m, 8))
    tv = min(tv, _round_up(vocab, 128))
    m_pad = _round_up(m, tm)
    v_pad = _round_up(vocab, tv)

    # Pad tails so vocab % tv and m % tm never truncate results.
    x2 = jnp.pad(x.reshape(m, d_model), ((0, m_pad - m), (0, 0)))
    w2 = jnp.pad(emb, ((0, v_pad - vocab), (0, 0)))
    b2 = jnp.pad(bias.reshape(1, vocab), ((0, 0), (0, v_pad - vocab)))

    out = pl.pallas_call(
        functools.partial(_linear_kernel, inv_scale=inv_scale),
        out_shape=jax.ShapeDtypeStruct((m_pad, v_pad), x.dtype),
        grid_spec=pltpu.PrefetchScalarGridSpec(
            num_scalar_prefetch=0,
            grid=(m_pad // tm, v_pad // tv),
            in_specs=[
                pl.BlockSpec((tm, d_model), lambda i, j: (i, 0)),   # activations
                pl.BlockSpec((tv, d_model), lambda i, j: (j, 0)),   # weight rows
                pl.BlockSpec((1, tv), lambda i, j: (0, j)),         # bias slice
            ],
            out_specs=pl.BlockSpec((tm, tv), lambda i, j: (i, j)),
        ),
        compiler_params=pltpu.CompilerParams(
            dimension_semantics=("parallel", "parallel"),
            vmem_limit_bytes=64 * 1024 * 1024),
    )(x2, w2, b2)
    return out[:m, :vocab].reshape(b, s, vocab)


# ----------------------------------------------------------------------------
# Module wrapper
# ----------------------------------------------------------------------------
class SharedEmbeddingLayerPallas:
    def __init__(self, vocab_size, d_model, key):
        self.d_model = d_model
        self.vocab_size = vocab_size
        # nn.Embedding default init is N(0, 1); output_bias is zeros.
        self.embedding_weight = jax.random.normal(
            key, (vocab_size, d_model), dtype=jnp.float32)
        self.output_bias = jnp.zeros((vocab_size,), dtype=jnp.float32)

    def __call__(self, x, mode="embedding"):
        if mode == "embedding":
            return embedding_mode(x, self.embedding_weight)
        elif mode == "linear":
            return linear_mode(x, self.embedding_weight, self.output_bias)
        else:
            raise ValueError(
                f"Only 'embedding' and 'linear' are valid modes. Value: {mode}")


if __name__ == "__main__":
    vocab_size, d_model = 256, 128
    batch, seq = 2, 8

    root = jax.random.PRNGKey(0)
    k_emb, k_ids, k_x = jax.random.split(root, 3)

    layer = SharedEmbeddingLayerPallas(vocab_size, d_model, k_emb)

    # --- embedding mode ---
    ids = jax.random.randint(k_ids, (batch, seq), 0, vocab_size, dtype=jnp.int32)
    y_emb = jax.block_until_ready(layer(ids, mode="embedding"))
    ref_emb = layer.embedding_weight[ids] * math.sqrt(d_model)
    assert y_emb.shape == (batch, seq, d_model)
    assert jnp.allclose(y_emb, ref_emb, atol=1e-5, rtol=1e-5)

    # --- linear (tied output projection) mode ---
    x = jax.random.normal(k_x, (batch, seq, d_model), dtype=jnp.float32)
    y_lin = jax.block_until_ready(layer(x, mode="linear"))
    ref_lin = (jnp.einsum("bsd,vd->bsv", x, layer.embedding_weight)
               + layer.output_bias) / math.sqrt(d_model)
    assert y_lin.shape == (batch, seq, vocab_size)
    assert jnp.allclose(y_lin, ref_lin, atol=1e-4, rtol=1e-4)

    print("KERNEL_OK")
</pallas_src>

<mosaic_0001>
module attributes {stable_mosaic.version = 11 : i64} {
  func.func @_embed_kernel(%arg0: i32, %arg1: memref<16xi32, #tpu.memory_space<smem>>, %arg2: memref<256x128xf32, #tpu.memory_space<vmem>>, %arg3: memref<16x128xf32, #tpu.memory_space<vmem>>) attributes {dimension_semantics = [#tpu.dimension_semantics<parallel>], iteration_bounds = array<i64: 1>, scalar_prefetch = 1 : i64, scratch_operands = 0 : i64, tpu.core_type = #tpu.core_type<tc>, window_params = [{pipeline_mode = #tpu.pipeline_mode<synchronous>, transform_indices = @transform_0, window_bounds = array<i64: 256, 128>}, {transform_indices = @transform_1, window_bounds = array<i64: 16, 128>}]} {
    %c16_i32 = arith.constant 16 : i32
    %0 = arith.muli %arg0, %c16_i32 : i32
    %c0_i32 = arith.constant 0 : i32
    %1 = arith.addi %0, %c0_i32 : i32
    %2 = arith.index_cast %1 : i32 to index
    %3 = memref.load %arg1[%2] : memref<16xi32, #tpu.memory_space<smem>>
    %4 = arith.index_cast %3 : i32 to index
    %c0 = arith.constant 0 : index
    %5 = vector.load %arg2[%4, %c0] : memref<256x128xf32, #tpu.memory_space<vmem>>, vector<1x128xf32>
    %cst = arith.constant 11.3137083 : f32
    %6 = vector.broadcast %cst : f32 to vector<1x128xf32>
    %7 = arith.mulf %5, %6 : vector<1x128xf32>
    %8 = arith.index_cast %c0_i32 : i32 to index
    %c0_0 = arith.constant 0 : index
    %9 = vector.load %arg3[%8, %c0_0] : memref<16x128xf32, #tpu.memory_space<vmem>>, vector<1x128xf32>
    tpu.vector_store %arg3[%8, %c0_0], %7 {strides = array<i32>} : memref<16x128xf32, #tpu.memory_space<vmem>>, vector<1x128xf32>,
    %c1_i32 = arith.constant 1 : i32
    %10 = arith.addi %0, %c1_i32 : i32
    %11 = arith.index_cast %10 : i32 to index
    %12 = memref.load %arg1[%11] : memref<16xi32, #tpu.memory_space<smem>>
    %13 = arith.index_cast %12 : i32 to index
    %c0_1 = arith.constant 0 : index
    %14 = vector.load %arg2[%13, %c0_1] : memref<256x128xf32, #tpu.memory_space<vmem>>, vector<1x128xf32>
    %cst_2 = arith.constant 11.3137083 : f32
    %15 = vector.broadcast %cst_2 : f32 to vector<1x128xf32>
    %16 = arith.mulf %14, %15 : vector<1x128xf32>
    %17 = arith.index_cast %c1_i32 : i32 to index
    %c0_3 = arith.constant 0 : index
    %18 = vector.load %arg3[%17, %c0_3] : memref<16x128xf32, #tpu.memory_space<vmem>>, vector<1x128xf32>
    tpu.vector_store %arg3[%17, %c0_3], %16 {strides = array<i32>} : memref<16x128xf32, #tpu.memory_space<vmem>>, vector<1x128xf32>,
    %c2_i32 = arith.constant 2 : i32
    %19 = arith.addi %0, %c2_i32 : i32
    %20 = arith.index_cast %19 : i32 to index
    %21 = memref.load %arg1[%20] : memref<16xi32, #tpu.memory_space<smem>>
    %22 = arith.index_cast %21 : i32 to index
    %c0_4 = arith.constant 0 : index
    %23 = vector.load %arg2[%22, %c0_4] : memref<256x128xf32, #tpu.memory_space<vmem>>, vector<1x128xf32>
    %cst_5 = arith.constant 11.3137083 : f32
    %24 = vector.broadcast %cst_5 : f32 to vector<1x128xf32>
    %25 = arith.mulf %23, %24 : vector<1x128xf32>
    %26 = arith.index_cast %c2_i32 : i32 to index
    %c0_6 = arith.constant 0 : index
    %27 = vector.load %arg3[%26, %c0_6] : memref<16x128xf32, #tpu.memory_space<vmem>>, vector<1x128xf32>
    tpu.vector_store %arg3[%26, %c0_6], %25 {strides = array<i32>} : memref<16x128xf32, #tpu.memory_space<vmem>>, vector<1x128xf32>,
    %c3_i32 = arith.constant 3 : i32
    %28 = arith.addi %0, %c3_i32 : i32
    %29 = arith.index_cast %28 : i32 to index
    %30 = memref.load %arg1[%29] : memref<16xi32, #tpu.memory_space<smem>>
    %31 = arith.index_cast %30 : i32 to index
    %c0_7 = arith.constant 0 : index
    %32 = vector.load %arg2[%31, %c0_7] : memref<256x128xf32, #tpu.memory_space<vmem>>, vector<1x128xf32>
    %cst_8 = arith.constant 11.3137083 : f32
    %33 = vector.broadcast %cst_8 : f32 to vector<1x128xf32>
    %34 = arith.mulf %32, %33 : vector<1x128xf32>
    %35 = arith.index_cast %c3_i32 : i32 to index
    %c0_9 = arith.constant 0 : index
    %36 = vector.load %arg3[%35, %c0_9] : memref<16x128xf32, #tpu.memory_space<vmem>>, vector<1x128xf32>
    tpu.vector_store %arg3[%35, %c0_9], %34 {strides = array<i32>} : memref<16x128xf32, #tpu.memory_space<vmem>>, vector<1x128xf32>,
    %c4_i32 = arith.constant 4 : i32
    %37 = arith.addi %0, %c4_i32 : i32
    %38 = arith.index_cast %37 : i32 to index
    %39 = memref.load %arg1[%38] : memref<16xi32, #tpu.memory_space<smem>>
    %40 = arith.index_cast %39 : i32 to index
    %c0_10 = arith.constant 0 : index
    %41 = vector.load %arg2[%40, %c0_10] : memref<256x128xf32, #tpu.memory_space<vmem>>, vector<1x128xf32>
    %cst_11 = arith.constant 11.3137083 : f32
    %42 = vector.broadcast %cst_11 : f32 to vector<1x128xf32>
    %43 = arith.mulf %41, %42 : vector<1x128xf32>
    %44 = arith.index_cast %c4_i32 : i32 to index
    %c0_12 = arith.constant 0 : index
    %45 = vector.load %arg3[%44, %c0_12] : memref<16x128xf32, #tpu.memory_space<vmem>>, vector<1x128xf32>
    tpu.vector_store %arg3[%44, %c0_12], %43 {strides = array<i32>} : memref<16x128xf32, #tpu.memory_space<vmem>>, vector<1x128xf32>,
    %c5_i32 = arith.constant 5 : i32
    %46 = arith.addi %0, %c5_i32 : i32
    %47 = arith.index_cast %46 : i32 to index
    %48 = memref.load %arg1[%47] : memref<16xi32, #tpu.memory_space<smem>>
    %49 = arith.index_cast %48 : i32 to index
    %c0_13 = arith.constant 0 : index
    %50 = vector.load %arg2[%49, %c0_13] : memref<256x128xf32, #tpu.memory_space<vmem>>, vector<1x128xf32>
    %cst_14 = arith.constant 11.3137083 : f32
    %51 = vector.broadcast %cst_14 : f32 to vector<1x128xf32>
    %52 = arith.mulf %50, %51 : vector<1x128xf32>
    %53 = arith.index_cast %c5_i32 : i32 to index
    %c0_15 = arith.constant 0 : index
    %54 = vector.load %arg3[%53, %c0_15] : memref<16x128xf32, #tpu.memory_space<vmem>>, vector<1x128xf32>
    tpu.vector_store %arg3[%53, %c0_15], %52 {strides = array<i32>} : memref<16x128xf32, #tpu.memory_space<vmem>>, vector<1x128xf32>,
    %c6_i32 = arith.constant 6 : i32
    %55 = arith.addi %0, %c6_i32 : i32
    %56 = arith.index_cast %55 : i32 to index
    %57 = memref.load %arg1[%56] : memref<16xi32, #tpu.memory_space<smem>>
    %58 = arith.index_cast %57 : i32 to index
    %c0_16 = arith.constant 0 : index
    %59 = vector.load %arg2[%58, %c0_16] : memref<256x128xf32, #tpu.memory_space<vmem>>, vector<1x128xf32>
    %cst_17 = arith.constant 11.3137083 : f32
    %60 = vector.broadcast %cst_17 : f32 to vector<1x128xf32>
    %61 = arith.mulf %59, %60 : vector<1x128xf32>
    %62 = arith.index_cast %c6_i32 : i32 to index
    %c0_18 = arith.constant 0 : index
    %63 = vector.load %arg3[%62, %c0_18] : memref<16x128xf32, #tpu.memory_space<vmem>>, vector<1x128xf32>
    tpu.vector_store %arg3[%62, %c0_18], %61 {strides = array<i32>} : memref<16x128xf32, #tpu.memory_space<vmem>>, vector<1x128xf32>,
    %c7_i32 = arith.constant 7 : i32
    %64 = arith.addi %0, %c7_i32 : i32
    %65 = arith.index_cast %64 : i32 to index
    %66 = memref.load %arg1[%65] : memref<16xi32, #tpu.memory_space<smem>>
    %67 = arith.index_cast %66 : i32 to index
    %c0_19 = arith.constant 0 : index
    %68 = vector.load %arg2[%67, %c0_19] : memref<256x128xf32, #tpu.memory_space<vmem>>, vector<1x128xf32>
    %cst_20 = arith.constant 11.3137083 : f32
    %69 = vector.broadcast %cst_20 : f32 to vector<1x128xf32>
    %70 = arith.mulf %68, %69 : vector<1x128xf32>
    %71 = arith.index_cast %c7_i32 : i32 to index
    %c0_21 = arith.constant 0 : index
    %72 = vector.load %arg3[%71, %c0_21] : memref<16x128xf32, #tpu.memory_space<vmem>>, vector<1x128xf32>
    tpu.vector_store %arg3[%71, %c0_21], %70 {strides = array<i32>} : memref<16x128xf32, #tpu.memory_space<vmem>>, vector<1x128xf32>,
    %c8_i32 = arith.constant 8 : i32
    %73 = arith.addi %0, %c8_i32 : i32
    %74 = arith.index_cast %73 : i32 to index
    %75 = memref.load %arg1[%74] : memref<16xi32, #tpu.memory_space<smem>>
    %76 = arith.index_cast %75 : i32 to index
    %c0_22 = arith.constant 0 : index
    %77 = vector.load %arg2[%76, %c0_22] : memref<256x128xf32, #tpu.memory_space<vmem>>, vector<1x128xf32>
    %cst_23 = arith.constant 11.3137083 : f32
    %78 = vector.broadcast %cst_23 : f32 to vector<1x128xf32>
    %79 = arith.mulf %77, %78 : vector<1x128xf32>
    %80 = arith.index_cast %c8_i32 : i32 to index
    %c0_24 = arith.constant 0 : index
    %81 = vector.load %arg3[%80, %c0_24] : memref<16x128xf32, #tpu.memory_space<vmem>>, vector<1x128xf32>
    tpu.vector_store %arg3[%80, %c0_24], %79 {strides = array<i32>} : memref<16x128xf32, #tpu.memory_space<vmem>>, vector<1x128xf32>,
    %c9_i32 = arith.constant 9 : i32
    %82 = arith.addi %0, %c9_i32 : i32
    %83 = arith.index_cast %82 : i32 to index
    %84 = memref.load %arg1[%83] : memref<16xi32, #tpu.memory_space<smem>>
    %85 = arith.index_cast %84 : i32 to index
    %c0_25 = arith.constant 0 : index
    %86 = vector.load %arg2[%85, %c0_25] : memref<256x128xf32, #tpu.memory_space<vmem>>, vector<1x128xf32>
    %cst_26 = arith.constant 11.3137083 : f32
    %87 = vector.broadcast %cst_26 : f32 to vector<1x128xf32>
    %88 = arith.mulf %86, %87 : vector<1x128xf32>
    %89 = arith.index_cast %c9_i32 : i32 to index
    %c0_27 = arith.constant 0 : index
    %90 = vector.load %arg3[%89, %c0_27] : memref<16x128xf32, #tpu.memory_space<vmem>>, vector<1x128xf32>
    tpu.vector_store %arg3[%89, %c0_27], %88 {strides = array<i32>} : memref<16x128xf32, #tpu.memory_space<vmem>>, vector<1x128xf32>,
    %c10_i32 = arith.constant 10 : i32
    %91 = arith.addi %0, %c10_i32 : i32
    %92 = arith.index_cast %91 : i32 to index
    %93 = memref.load %arg1[%92] : memref<16xi32, #tpu.memory_space<smem>>
    %94 = arith.index_cast %93 : i32 to index
    %c0_28 = arith.constant 0 : index
    %95 = vector.load %arg2[%94, %c0_28] : memref<256x128xf32, #tpu.memory_space<vmem>>, vector<1x128xf32>
    %cst_29 = arith.constant 11.3137083 : f32
    %96 = vector.broadcast %cst_29 : f32 to vector<1x128xf32>
    %97 = arith.mulf %95, %96 : vector<1x128xf32>
    %98 = arith.index_cast %c10_i32 : i32 to index
    %c0_30 = arith.constant 0 : index
    %99 = vector.load %arg3[%98, %c0_30] : memref<16x128xf32, #tpu.memory_space<vmem>>, vector<1x128xf32>
    tpu.vector_store %arg3[%98, %c0_30], %97 {strides = array<i32>} : memref<16x128xf32, #tpu.memory_space<vmem>>, vector<1x128xf32>,
    %c11_i32 = arith.constant 11 : i32
    %100 = arith.addi %0, %c11_i32 : i32
    %101 = arith.index_cast %100 : i32 to index
    %102 = memref.load %arg1[%101] : memref<16xi32, #tpu.memory_space<smem>>
    %103 = arith.index_cast %102 : i32 to index
    %c0_31 = arith.constant 0 : index
    %104 = vector.load %arg2[%103, %c0_31] : memref<256x128xf32, #tpu.memory_space<vmem>>, vector<1x128xf32>
    %cst_32 = arith.constant 11.3137083 : f32
    %105 = vector.broadcast %cst_32 : f32 to vector<1x128xf32>
    %106 = arith.mulf %104, %105 : vector<1x128xf32>
    %107 = arith.index_cast %c11_i32 : i32 to index
    %c0_33 = arith.constant 0 : index
    %108 = vector.load %arg3[%107, %c0_33] : memref<16x128xf32, #tpu.memory_space<vmem>>, vector<1x128xf32>
    tpu.vector_store %arg3[%107, %c0_33], %106 {strides = array<i32>} : memref<16x128xf32, #tpu.memory_space<vmem>>, vector<1x128xf32>,
    %c12_i32 = arith.constant 12 : i32
    %109 = arith.addi %0, %c12_i32 : i32
    %110 = arith.index_cast %109 : i32 to index
    %111 = memref.load %arg1[%110] : memref<16xi32, #tpu.memory_space<smem>>
    %112 = arith.index_cast %111 : i32 to index
    %c0_34 = arith.constant 0 : index
    %113 = vector.load %arg2[%112, %c0_34] : memref<256x128xf32, #tpu.memory_space<vmem>>, vector<1x128xf32>
    %cst_35 = arith.constant 11.3137083 : f32
    %114 = vector.broadcast %cst_35 : f32 to vector<1x128xf32>
    %115 = arith.mulf %113, %114 : vector<1x128xf32>
    %116 = arith.index_cast %c12_i32 : i32 to index
    %c0_36 = arith.constant 0 : index
    %117 = vector.load %arg3[%116, %c0_36] : memref<16x128xf32, #tpu.memory_space<vmem>>, vector<1x128xf32>
    tpu.vector_store %arg3[%116, %c0_36], %115 {strides = array<i32>} : memref<16x128xf32, #tpu.memory_space<vmem>>, vector<1x128xf32>,
    %c13_i32 = arith.constant 13 : i32
    %118 = arith.addi %0, %c13_i32 : i32
    %119 = arith.index_cast %118 : i32 to index
    %120 = memref.load %arg1[%119] : memref<16xi32, #tpu.memory_space<smem>>
    %121 = arith.index_cast %120 : i32 to index
    %c0_37 = arith.constant 0 : index
    %122 = vector.load %arg2[%121, %c0_37] : memref<256x128xf32, #tpu.memory_space<vmem>>, vector<1x128xf32>
    %cst_38 = arith.constant 11.3137083 : f32
    %123 = vector.broadcast %cst_38 : f32 to vector<1x128xf32>
    %124 = arith.mulf %122, %123 : vector<1x128xf32>
    %125 = arith.index_cast %c13_i32 : i32 to index
    %c0_39 = arith.constant 0 : index
    %126 = vector.load %arg3[%125, %c0_39] : memref<16x128xf32, #tpu.memory_space<vmem>>, vector<1x128xf32>
    tpu.vector_store %arg3[%125, %c0_39], %124 {strides = array<i32>} : memref<16x128xf32, #tpu.memory_space<vmem>>, vector<1x128xf32>,
    %c14_i32 = arith.constant 14 : i32
    %127 = arith.addi %0, %c14_i32 : i32
    %128 = arith.index_cast %127 : i32 to index
    %129 = memref.load %arg1[%128] : memref<16xi32, #tpu.memory_space<smem>>
    %130 = arith.index_cast %129 : i32 to index
    %c0_40 = arith.constant 0 : index
    %131 = vector.load %arg2[%130, %c0_40] : memref<256x128xf32, #tpu.memory_space<vmem>>, vector<1x128xf32>
    %cst_41 = arith.constant 11.3137083 : f32
    %132 = vector.broadcast %cst_41 : f32 to vector<1x128xf32>
    %133 = arith.mulf %131, %132 : vector<1x128xf32>
    %134 = arith.index_cast %c14_i32 : i32 to index
    %c0_42 = arith.constant 0 : index
    %135 = vector.load %arg3[%134, %c0_42] : memref<16x128xf32, #tpu.memory_space<vmem>>, vector<1x128xf32>
    tpu.vector_store %arg3[%134, %c0_42], %133 {strides = array<i32>} : memref<16x128xf32, #tpu.memory_space<vmem>>, vector<1x128xf32>,
    %c15_i32 = arith.constant 15 : i32
    %136 = arith.addi %0, %c15_i32 : i32
    %137 = arith.index_cast %136 : i32 to index
    %138 = memref.load %arg1[%137] : memref<16xi32, #tpu.memory_space<smem>>
    %139 = arith.index_cast %138 : i32 to index
    %c0_43 = arith.constant 0 : index
    %140 = vector.load %arg2[%139, %c0_43] : memref<256x128xf32, #tpu.memory_space<vmem>>, vector<1x128xf32>
    %cst_44 = arith.constant 11.3137083 : f32
    %141 = vector.broadcast %cst_44 : f32 to vector<1x128xf32>
    %142 = arith.mulf %140, %141 : vector<1x128xf32>
    %143 = arith.index_cast %c15_i32 : i32 to index
    %c0_45 = arith.constant 0 : index
    %144 = vector.load %arg3[%143, %c0_45] : memref<16x128xf32, #tpu.memory_space<vmem>>, vector<1x128xf32>
    tpu.vector_store %arg3[%143, %c0_45], %142 {strides = array<i32>} : memref<16x128xf32, #tpu.memory_space<vmem>>, vector<1x128xf32>,
    %c16_i32_46 = arith.constant 16 : i32
    return
  }
  func.func @transform_0(%arg0: i32, %arg1: memref<16xi32, #tpu.memory_space<smem>>) -> (i32, i32) {
    %c0_i32 = arith.constant 0 : i32
    %c0_i32_0 = arith.constant 0 : i32
    %c0_i32_1 = arith.constant 0 : i32
    return %c0_i32, %c0_i32_0 : i32, i32
  }
  func.func @transform_1(%arg0: i32, %arg1: memref<16xi32, #tpu.memory_space<smem>>) -> (i32, i32) {
    %c0_i32 = arith.constant 0 : i32
    %c0_i32_0 = arith.constant 0 : i32
    return %arg0, %c0_i32 : i32, i32
  }
}

</mosaic_0001>

<llo_original>
// kernel: tpu_custom_call.1
$region0: #{tpu_custom_call.1}
  #allocation0 [shape = 'u32[]', space=smem, size = 0x4, offset = 0x4, fixed_abs, tag = 'smem constant byte address 0x4 - core index']
  #allocation1 [shape = 'u32[144,128]{1,0:T(1,128)}', space=vmem, size = 0x12000, scoped, tag = 'internal scratch']
  #allocation2 [shape = 's32[1]{0}', space=sflag, size = 0x4, scoped, tag = 'scoped memory for tpu_custom_call.1']
  #allocation3 [shape = 'u8[512]{0}', space=smem, size = 0x200, scoped, tag = 'prefetched SMEM operand 0']
  %s0 = inlined_call_operand.hbm [shape: s32[16], index: 0, kind: input, shape index: {}]
  %s1 = inlined_call_operand.hbm [shape: f32[256,128], index: 1, kind: input, shape index: {}]
  %s2 = inlined_call_operand.hbm [shape: f32[16,128], index: 2, kind: output, shape index: {}]
  %s3 = sld [smem:[#allocation0]]
  $region18: #{tpu_custom_call.1} parent=0
    _
  %s5 = ssub.s32 1, %s3
  %s6 = scalar_select 0, %s5, %s3
  %8 = dma.hbm_to_smem %s0, 16, [#allocation3], [#allocation2]
  %9 = dma.done [#allocation2], 16
  %10 = sfence
  $region1: #{tpu_custom_call.1} parent=0
    #allocation4 [shape = 'u8[131072]{0}', space=vmem, size = 0x20000, scoped, tag = 'input window, operand 1, single buffered']
    #allocation5 [shape = 's32[1]{0}', space=sflag, size = 0x4, scoped, tag = 'scoped memory for tpu_custom_call.1']
    #allocation6 [shape = 's32[1]{0}', space=sflag, size = 0x4, scoped, tag = 'scoped memory for tpu_custom_call.1']
    #allocation7 [shape = 'u8[8192]{0}', space=vmem, size = 0x2000, scoped, tag = 'output window, operand 0, single buffered']
    %11 = vsyncpa [#allocation5], 0
    %12 = vsyncpa [#allocation6], 0
    // Predicated region
    $region2: #{tpu_custom_call.1} parent=1 // pred_check
      _
    $region3: #{tpu_custom_call.1} parent=1 // pred_check_branch
      %14 = sbr.rel (0) target = $region5
    $region4: #{tpu_custom_call.1} parent=1 // pred_region
      %s16 = ssub.s32 4096, 4096
      %17 = vsyncadd [#allocation5], %s16
      %s18 = sshll.u32 [#allocation4], 4
      %s19 = int_to_ptr.vmem [resolvable:$true] %s18
      %24 = dma.hbm_to_vmem [thread:$0]  %s1, 4096, %s19, [#allocation5], 128, 128, 8
    $region5: #{tpu_custom_call.1} parent=1 // pred_fallthru
      _
    // Predicated region
    $region6: #{tpu_custom_call.1} parent=1 // pred_check
      _
    $region7: #{tpu_custom_call.1} parent=1 // pred_check_branch
      %26 = sbr.rel (0) target = $region9
    $region8: #{tpu_custom_call.1} parent=1 // pred_region
      %27 = dma.done [#allocation5], 4096
    $region9: #{tpu_custom_call.1} parent=1 // pred_fallthru
      _
    %s28 = smul.u32 0, 16
    %s29 = sld [smem:[#allocation3 + %s28]]
    %s30 = scalar_lea.vmem [#allocation4], %s29
    %v31 = vld [vmem:[%s30] sm:$0x1]
    %v32 = vmul.f32 %v31, 11.313708
    %33 = vst [vmem:[#allocation7] sm:$0x1] %v32
    %s34 = sadd.s32 %s28, 1
    %s35 = sld [smem:[#allocation3 + %s34]]
    %s36 = scalar_lea.vmem [#allocation4], %s35
    %v37 = vld [vmem:[%s36] sm:$0x1]
    %v38 = vmul.f32 %v37, 11.313708
    %39 = vst [vmem:[#allocation7 + $0x1] sm:$0x1] %v38
    %s40 = sadd.s32 %s28, 2
    %s41 = sld [smem:[#allocation3 + %s40]]
    %s42 = scalar_lea.vmem [#allocation4], %s41
    %v43 = vld [vmem:[%s42] sm:$0x1]
    %v44 = vmul.f32 %v43, 11.313708
    %45 = vst [vmem:[#allocation7 + $0x2] sm:$0x1] %v44
    %s46 = sadd.s32 %s28, 3
    %s47 = sld [smem:[#allocation3 + %s46]]
    %s48 = scalar_lea.vmem [#allocation4], %s47
    %v49 = vld [vmem:[%s48] sm:$0x1]
    %v50 = vmul.f32 %v49, 11.313708
    %51 = vst [vmem:[#allocation7 + $0x3] sm:$0x1] %v50
    %s52 = sadd.s32 %s28, 4
    %s53 = sld [smem:[#allocation3 + %s52]]
    %s54 = scalar_lea.vmem [#allocation4], %s53
    %v55 = vld [vmem:[%s54] sm:$0x1]
    %v56 = vmul.f32 %v55, 11.313708
    %57 = vst [vmem:[#allocation7 + $0x4] sm:$0x1] %v56
    %s58 = sadd.s32 %s28, 5
    %s59 = sld [smem:[#allocation3 + %s58]]
    %s60 = scalar_lea.vmem [#allocation4], %s59
    %v61 = vld [vmem:[%s60] sm:$0x1]
    %v62 = vmul.f32 %v61, 11.313708
    %63 = vst [vmem:[#allocation7 + $0x5] sm:$0x1] %v62
    %s64 = sadd.s32 %s28, 6
    %s65 = sld [smem:[#allocation3 + %s64]]
    %s66 = scalar_lea.vmem [#allocation4], %s65
    %v67 = vld [vmem:[%s66] sm:$0x1]
    %v68 = vmul.f32 %v67, 11.313708
    %69 = vst [vmem:[#allocation7 + $0x6] sm:$0x1] %v68
    %s70 = sadd.s32 %s28, 7
    %s71 = sld [smem:[#allocation3 + %s70]]
    %s72 = scalar_lea.vmem [#allocation4], %s71
    %v73 = vld [vmem:[%s72] sm:$0x1]
    %v74 = vmul.f32 %v73, 11.313708
    %75 = vst [vmem:[#allocation7 + $0x7] sm:$0x1] %v74
    %s76 = sadd.s32 %s28, 8
    %s77 = sld [smem:[#allocation3 + %s76]]
    %s78 = scalar_lea.vmem [#allocation4], %s77
    %v79 = vld [vmem:[%s78] sm:$0x1]
    %v80 = vmul.f32 %v79, 11.313708
    %81 = vst [vmem:[#allocation7 + $0x8] sm:$0x1] %v80
    %s82 = sadd.s32 %s28, 9
    %s83 = sld [smem:[#allocation3 + %s82]]
    %s84 = scalar_lea.vmem [#allocation4], %s83
    %v85 = vld [vmem:[%s84] sm:$0x1]
    %v86 = vmul.f32 %v85, 11.313708
    %87 = vst [vmem:[#allocation7 + $0x9] sm:$0x1] %v86
    %s88 = sadd.s32 %s28, 10
    %s89 = sld [smem:[#allocation3 + %s88]]
    %s90 = scalar_lea.vmem [#allocation4], %s89
    %v91 = vld [vmem:[%s90] sm:$0x1]
    %v92 = vmul.f32 %v91, 11.313708
    %93 = vst [vmem:[#allocation7 + $0xa] sm:$0x1] %v92
    %s94 = sadd.s32 %s28, 11
    %s95 = sld [smem:[#allocation3 + %s94]]
    %s96 = scalar_lea.vmem [#allocation4], %s95
    %v97 = vld [vmem:[%s96] sm:$0x1]
    %v98 = vmul.f32 %v97, 11.313708
    %99 = vst [vmem:[#allocation7 + $0xb] sm:$0x1] %v98
    %s100 = sadd.s32 %s28, 12
    %s101 = sld [smem:[#allocation3 + %s100]]
    %s102 = scalar_lea.vmem [#allocation4], %s101
    %v103 = vld [vmem:[%s102] sm:$0x1]
    %v104 = vmul.f32 %v103, 11.313708
    %105 = vst [vmem:[#allocation7 + $0xc] sm:$0x1] %v104
    %s106 = sadd.s32 %s28, 13
    %s107 = sld [smem:[#allocation3 + %s106]]
    %s108 = scalar_lea.vmem [#allocation4], %s107
    %v109 = vld [vmem:[%s108] sm:$0x1]
    %v110 = vmul.f32 %v109, 11.313708
    %111 = vst [vmem:[#allocation7 + $0xd] sm:$0x1] %v110
    %s112 = sadd.s32 %s28, 14
    %s113 = sld [smem:[#allocation3 + %s112]]
    %s114 = scalar_lea.vmem [#allocation4], %s113
    %v115 = vld [vmem:[%s114] sm:$0x1]
    %v116 = vmul.f32 %v115, 11.313708
    %117 = vst [vmem:[#allocation7 + $0xe] sm:$0x1] %v116
    %s118 = sadd.s32 %s28, 15
    %s119 = sld [smem:[#allocation3 + %s118]]
    %s120 = scalar_lea.vmem [#allocation4], %s119
    %v121 = vld [vmem:[%s120] sm:$0x1]
    %v122 = vmul.f32 %v121, 11.313708
    %123 = vst [vmem:[#allocation7 + $0xf] sm:$0x1] %v122
    // Predicated region
    $region10: #{tpu_custom_call.1} parent=1 // pred_check
      _
    $region11: #{tpu_custom_call.1} parent=1 // pred_check_branch
      %125 = sbr.rel (0) target = $region13
    $region12: #{tpu_custom_call.1} parent=1 // pred_region
      %s127 = ssub.s32 256, 256
      %128 = vsyncadd [#allocation6], %s127
      %s129 = sshll.u32 [#allocation7], 4
      %s130 = int_to_ptr.vmem [resolvable:$true] %s129
      %135 = dma.vmem_to_hbm [thread:$0]  %s130, 256, %s2, [#allocation6], 128, 128, 8
    $region13: #{tpu_custom_call.1} parent=1 // pred_fallthru
      _
    // Predicated region
    $region14: #{tpu_custom_call.1} parent=1 // pred_check
      _
    $region15: #{tpu_custom_call.1} parent=1 // pred_check_branch
      %137 = sbr.rel (0) target = $region17
    $region16: #{tpu_custom_call.1} parent=1 // pred_region
      %138 = dma.done [#allocation6], 256
    $region17: #{tpu_custom_call.1} parent=1 // pred_fallthru
      _
    %139 = vsyncpa [#allocation5], 1
    %140 = vsyncpa [#allocation6], 1

</llo_original>
